<compile_context>
chip_gen: v7x
topology: tpu7x:2x2x1
jax: 0.10.0
libtpu: 0.0.40
codegen_flags: <defaults>
</compile_context>

<pallas_src>
import jax
import jax.numpy as jnp
from jax.experimental import pallas as pl
from jax.experimental.pallas import tpu as pltpu


# ---------------------------------------------------------------------------
# VMEM / HBM budgeting helpers
# ---------------------------------------------------------------------------
def _vmem_limit_bytes():
    """Scoped-VMEM limit safe across generations (v5e/v6e: 128 MiB, v7x: 64 MiB)."""
    try:
        cap = pltpu.get_tpu_info().vmem_capacity_bytes
        return int(max(32 << 20, min(cap - (16 << 20), 96 << 20)))
    except Exception:
        return 48 << 20


def _target_step_bytes():
    """Per-step hidden-state HBM traffic targeting ~2-4 us of DMA time."""
    try:
        cap = pltpu.get_tpu_info().vmem_capacity_bytes
        if cap <= (64 << 20):       # v7x: ~3.2 TB/s HBM
            return 10 << 20
        return 4 << 20              # v5e (~0.82 TB/s) / v6e (~1.35 TB/s)
    except Exception:
        return 4 << 20


def _cands(n, unit):
    """Divisors of n that are multiples of `unit`, plus n itself (full extent)."""
    c = {n}
    d = unit
    while d < n:
        if n % d == 0:
            c.add(d)
        d += unit
    return sorted(c)


def _choose_tiles(B, S, H, n_h, in_itemsize, out_itemsize, budget, target):
    """Pick (tb, ts, th) so that blocks + in-kernel f32 temporaries fit the VMEM
    budget, per-step hidden traffic is near `target`, and the grid has >= 4 steps
    when the shape allows it (>= 2 per v7x TensorCore)."""
    # tb sits on the sublane axis of the 2-D (tb, S_chunk) / (tb, th) blocks:
    # 8 rows per sublane tile for f32 output, 16 for bf16, 32 for int8.
    tb_unit = max(8, (8 * 4) // out_itemsize)
    tb_cands = _cands(B, tb_unit)
    th_cands = _cands(H, 128)       # lane axis of hidden / output blocks
    ts_cands = _cands(S, 128)       # lane axis of the 2-D mask block

    def vmem_need(tb, ts, th):
        blk_h = n_h * tb * ts * th * in_itemsize          # hidden blocks
        blk_m = tb * max(ts, 128) * 4                     # int mask block (padded)
        blk_o = tb * max(th, 128) * out_itemsize          # output block (padded)
        temps = (n_h + 1) * tb * ts * th * 4              # in-kernel f32 temporaries
        scratch = tb * max(th, 128) * 4 + tb * 128 * 4    # num / den accumulators
        return 2 * (blk_h + blk_m + blk_o) + temps + scratch   # 2x = double buffer

    best = None
    for ts in ts_cands:
        for th in th_cands:
            for tb in tb_cands:
                if vmem_need(tb, ts, th) > budget:
                    continue
                steps = (B // tb) * (S // ts) * (H // th)
                step_bytes = n_h * tb * ts * th * in_itemsize
                over = max(0.0, step_bytes / target - 1.0)
                under = max(0.0, 1.0 - step_bytes / target)
                pen = (2.0 * over + under                     # ~2-4 us/step sweet spot
                       + 0.25 * max(0, 4 - steps)             # >= 2 steps per v7x core
                       + 0.10 * (S // ts - 1))                # prefer unsplit reduction
                key = (pen, steps)
                if best is None or key < best[0]:
                    best = (key, (tb, ts, th))
    if best is None:
        # Nothing fits the budget: run the smallest legal block anyway.
        return tb_cands[0], ts_cands[0], th_cands[0]
    return best[1]


# ---------------------------------------------------------------------------
# Kernel
# ---------------------------------------------------------------------------
def _make_masked_avg_kernel(n_h):
    """out[b,:] = sum_s mean(hiddens)[b,s,:] * mask[b,s] / sum_s mask[b,s]."""
    half = 0.5 if n_h == 2 else 1.0   # the /2.0 of the two-hidden modes, folded
                                      # into the per-row scalar (bit-exact).

    def kernel(mask_ref, *refs):
        h_refs = refs[:n_h]
        out_ref = refs[n_h]
        num_acc = refs[n_h + 1]       # (tb, th) f32 scratch
        den_acc = refs[n_h + 2]       # (tb, 1)  f32 scratch
        s = pl.program_id(2)

        @pl.when(s == 0)
        def _init():
            num_acc[...] = jnp.zeros_like(num_acc)
            den_acc[...] = jnp.zeros_like(den_acc)

        m = mask_ref[...].astype(jnp.float32)              # (tb, ts) lane-dense
        acc = num_acc[...]
        for h_ref in h_refs:
            x = h_ref[...]                                 # (tb, ts, th), native dtype
            # mask is 0/1, so the multiply is exact in the input dtype; summation
            # accumulates in f32 (no whole-block f32 upcast for bf16 inputs).
            mx = x * m[:, :, None].astype(x.dtype)
            acc = acc + jnp.sum(mx, axis=1, dtype=jnp.float32)
        num_acc[...] = acc
        den_acc[...] = den_acc[...] + jnp.sum(m, axis=-1, keepdims=True)

        @pl.when(s == pl.num_programs(2) - 1)
        def _finalize():
            # Exact divide once per row (keeps 1e-5 tolerance); inf/nan for an
            # all-padding row, matching the PyTorch reference.
            scale = half / den_acc[...]                    # (tb, 1)
            out_ref[...] = (num_acc[...] * scale).astype(out_ref.dtype)

    return kernel


def _run_masked_avg(attention_mask, hiddens):
    """attention_mask: (B, S) int; hiddens: list of 1 or 2 (B, S, H) arrays."""
    B, S, H = hiddens[0].shape
    n_h = len(hiddens)
    in_dtype = hiddens[0].dtype
    in_itemsize = jnp.dtype(in_dtype).itemsize
    out_itemsize = in_itemsize
    mask_itemsize = jnp.dtype(attention_mask.dtype).itemsize

    vmem_limit = _vmem_limit_bytes()
    budget = int(vmem_limit * 0.75)
    tb, ts, th = _choose_tiles(B, S, H, n_h, in_itemsize, out_itemsize,
                               budget, _target_step_bytes())

    grid = (B // tb, H // th, S // ts)   # reduction (S) axis last
    kernel = _make_masked_avg_kernel(n_h)

    # Mask block index does not change with h -> no re-DMA across the H axis.
    mask_spec = pl.BlockSpec((tb, ts), lambda b, h, s: (b, s))
    h_spec = pl.BlockSpec((tb, ts, th), lambda b, h, s: (b, s, h))
    out_spec = pl.BlockSpec((tb, th), lambda b, h, s: (b, h))

    cost = pl.CostEstimate(
        flops=2 * n_h * B * S * H,
        transcendentals=0,
        bytes_accessed=(n_h * B * S * H * in_itemsize
                        + B * S * mask_itemsize
                        + B * H * out_itemsize))

    return pl.pallas_call(
        kernel,
        out_shape=jax.ShapeDtypeStruct((B, H), in_dtype),
        grid=grid,
        in_specs=[mask_spec] + [h_spec] * n_h,
        out_specs=out_spec,
        scratch_shapes=[pltpu.VMEM((tb, th), jnp.float32),
                        pltpu.VMEM((tb, 1), jnp.float32)],
        compiler_params=pltpu.CompilerParams(
            dimension_semantics=("parallel", "parallel", "arbitrary"),
            vmem_limit_bytes=vmem_limit),
        cost_estimate=cost,
    )(attention_mask, *hiddens)


# ---------------------------------------------------------------------------
# Pooler forward (mirrors the PyTorch module)
# ---------------------------------------------------------------------------
def pooler_forward(pooling, attention_mask, last_hidden, pooler_output, hidden_states):
    assert pooling in ['cls', 'pooler', 'last-avg', 'last2-avg', 'first-last-avg']
    if pooling == 'cls':
        # pure slicing, no compute -> glue JAX
        return last_hidden[:, 0, :]
    if pooling == 'pooler':
        # pass-through, no compute -> glue JAX
        return pooler_output

    if pooling == 'last-avg':
        return _run_masked_avg(attention_mask, [last_hidden])
    if pooling == 'last2-avg':
        return _run_masked_avg(attention_mask, [last_hidden, hidden_states[-2]])
    if pooling == 'first-last-avg':
        return _run_masked_avg(attention_mask, [last_hidden, hidden_states[1]])
    raise NotImplementedError


# ---------------------------------------------------------------------------
# Pure-JAX reference (for correctness checking only)
# ---------------------------------------------------------------------------
def pooler_ref(pooling, attention_mask, last_hidden, pooler_output, hidden_states):
    if pooling == 'cls':
        return last_hidden[:, 0, :]
    if pooling == 'pooler':
        return pooler_output
    m = attention_mask.astype(jnp.float32)
    if pooling == 'last-avg':
        h = last_hidden
    elif pooling == 'last2-avg':
        h = (last_hidden + hidden_states[-2]) / 2.0
    else:
        h = (last_hidden + hidden_states[1]) / 2.0
    return (h * m[:, :, None]).sum(1) / m.sum(-1)[:, None]


# ---------------------------------------------------------------------------
if __name__ == "__main__":
    B, S, H = 2, 8, 32
    n_layers = 4  # hidden_states has n_layers + 1 entries (embeddings first)

    key = jax.random.PRNGKey(0)
    keys = jax.random.split(key, n_layers + 3)

    hidden_states = tuple(
        jax.random.normal(keys[i], (B, S, H), dtype=jnp.float32)
        for i in range(n_layers + 1)
    )
    last_hidden = hidden_states[-1]
    pooler_output = jax.random.normal(keys[-2], (B, H), dtype=jnp.float32)

    # attention mask with ragged lengths [8, 5]
    lengths = jnp.array([8, 5], dtype=jnp.int32)
    attention_mask = (jnp.arange(S)[None, :] < lengths[:, None]).astype(jnp.int32)

    ok = True
    for pooling in ['cls', 'pooler', 'last-avg', 'last2-avg', 'first-last-avg']:
        out = pooler_forward(pooling, attention_mask, last_hidden,
                             pooler_output, hidden_states)
        out = jax.block_until_ready(out)
        ref = pooler_ref(pooling, attention_mask, last_hidden,
                         pooler_output, hidden_states)
        if out.shape != (B, H) or not jnp.allclose(out, ref, atol=1e-5, rtol=1e-5):
            ok = False
            print(f"MISMATCH in pooling={pooling}")

    if ok:
        print("KERNEL_OK")
</pallas_src>

<mosaic_0001>
module attributes {stable_mosaic.version = 11 : i64} {
  func.func @kernel(%arg0: i32, %arg1: i32, %arg2: i32, %arg3: memref<2x8xi32, #tpu.memory_space<vmem>>, %arg4: memref<2x8x32xf32, #tpu.memory_space<vmem>>, %arg5: memref<2x32xf32, #tpu.memory_space<vmem>>, %arg6: memref<2x32xf32, #tpu.memory_space<vmem>>, %arg7: memref<2x1xf32, #tpu.memory_space<vmem>>) attributes {dimension_semantics = [#tpu.dimension_semantics<parallel>, #tpu.dimension_semantics<parallel>, #tpu.dimension_semantics<arbitrary>], iteration_bounds = array<i64: 1, 1, 1>, scalar_prefetch = 0 : i64, scratch_operands = 2 : i64, tpu.core_type = #tpu.core_type<tc>, window_params = [{transform_indices = @transform_0, window_bounds = array<i64: 2, 8>}, {transform_indices = @transform_1, window_bounds = array<i64: 2, 8, 32>}, {transform_indices = @transform_2, window_bounds = array<i64: 2, 32>}]} {
    %c0_i32 = arith.constant 0 : i32
    %0 = arith.cmpi eq, %arg2, %c0_i32 : i32
    %1 = arith.extui %0 : i1 to i32
    %c0_i32_0 = arith.constant 0 : i32
    %2 = arith.cmpi ne, %1, %c0_i32_0 : i32
    scf.if %2 {
      %cst_16 = arith.constant 0.000000e+00 : f32
      %21 = vector.broadcast %cst_16 : f32 to vector<2x32xf32>
      %c0_17 = arith.constant 0 : index
      %c0_18 = arith.constant 0 : index
      %22 = vector.load %arg6[%c0_17, %c0_18] : memref<2x32xf32, #tpu.memory_space<vmem>>, vector<2x32xf32>
      tpu.vector_store %arg6[%c0_17, %c0_18], %21 {strides = array<i32>} : memref<2x32xf32, #tpu.memory_space<vmem>>, vector<2x32xf32>,
      %cst_19 = arith.constant 0.000000e+00 : f32
      %23 = vector.broadcast %cst_19 : f32 to vector<2x1xf32>
      %c0_20 = arith.constant 0 : index
      %c0_21 = arith.constant 0 : index
      %24 = vector.load %arg7[%c0_20, %c0_21] : memref<2x1xf32, #tpu.memory_space<vmem>>, vector<2x1xf32>
      tpu.vector_store %arg7[%c0_20, %c0_21], %23 {strides = array<i32>} : memref<2x1xf32, #tpu.memory_space<vmem>>, vector<2x1xf32>,
    } else {
    }
    %c0 = arith.constant 0 : index
    %c0_1 = arith.constant 0 : index
    %3 = vector.load %arg3[%c0, %c0_1] : memref<2x8xi32, #tpu.memory_space<vmem>>, vector<2x8xi32>
    %4 = arith.sitofp %3 : vector<2x8xi32> to vector<2x8xf32>
    %c0_2 = arith.constant 0 : index
    %c0_3 = arith.constant 0 : index
    %5 = vector.load %arg6[%c0_2, %c0_3] : memref<2x32xf32, #tpu.memory_space<vmem>>, vector<2x32xf32>
    %c0_4 = arith.constant 0 : index
    %c0_5 = arith.constant 0 : index
    %c0_6 = arith.constant 0 : index
    %6 = vector.load %arg4[%c0_4, %c0_5, %c0_6] : memref<2x8x32xf32, #tpu.memory_space<vmem>>, vector<2x8x32xf32>
    %7 = vector.shape_cast %4 : vector<2x8xf32> to vector<2x8x1xf32>
    %8 = vector.broadcast %7 : vector<2x8x1xf32> to vector<2x8x32xf32>
    %9 = arith.mulf %6, %8 : vector<2x8x32xf32>
    %cst = arith.constant dense<0.000000e+00> : vector<2x32xf32>
    %10 = vector.multi_reduction <add>, %9, %cst [1] : vector<2x8x32xf32> to vector<2x32xf32>
    %11 = arith.addf %5, %10 : vector<2x32xf32>
    %c0_7 = arith.constant 0 : index
    %c0_8 = arith.constant 0 : index
    %12 = vector.load %arg6[%c0_7, %c0_8] : memref<2x32xf32, #tpu.memory_space<vmem>>, vector<2x32xf32>
    tpu.vector_store %arg6[%c0_7, %c0_8], %11 {strides = array<i32>} : memref<2x32xf32, #tpu.memory_space<vmem>>, vector<2x32xf32>,
    %c0_9 = arith.constant 0 : index
    %c0_10 = arith.constant 0 : index
    %13 = vector.load %arg7[%c0_9, %c0_10] : memref<2x1xf32, #tpu.memory_space<vmem>>, vector<2x1xf32>
    %cst_11 = arith.constant dense<0.000000e+00> : vector<2xf32>
    %14 = vector.multi_reduction <add>, %4, %cst_11 [1] : vector<2x8xf32> to vector<2xf32>
    %15 = vector.shape_cast %14 : vector<2xf32> to vector<2x1xf32>
    %16 = arith.addf %13, %15 : vector<2x1xf32>
    %c0_12 = arith.constant 0 : index
    %c0_13 = arith.constant 0 : index
    %17 = vector.load %arg7[%c0_12, %c0_13] : memref<2x1xf32, #tpu.memory_space<vmem>>, vector<2x1xf32>
    tpu.vector_store %arg7[%c0_12, %c0_13], %16 {strides = array<i32>} : memref<2x1xf32, #tpu.memory_space<vmem>>, vector<2x1xf32>,
    %c0_i32_14 = arith.constant 0 : i32
    %18 = arith.cmpi eq, %arg2, %c0_i32_14 : i32
    %19 = arith.extui %18 : i1 to i32
    %c0_i32_15 = arith.constant 0 : i32
    %20 = arith.cmpi ne, %19, %c0_i32_15 : i32
    scf.if %20 {
      %c0_16 = arith.constant 0 : index
      %c0_17 = arith.constant 0 : index
      %21 = vector.load %arg7[%c0_16, %c0_17] : memref<2x1xf32, #tpu.memory_space<vmem>>, vector<2x1xf32>
      %cst_18 = arith.constant 1.000000e+00 : f32
      %22 = vector.broadcast %cst_18 : f32 to vector<2x1xf32>
      %23 = arith.divf %22, %21 : vector<2x1xf32>
      %c0_19 = arith.constant 0 : index
      %c0_20 = arith.constant 0 : index
      %24 = vector.load %arg6[%c0_19, %c0_20] : memref<2x32xf32, #tpu.memory_space<vmem>>, vector<2x32xf32>
      %25 = vector.broadcast %23 : vector<2x1xf32> to vector<2x32xf32>
      %26 = arith.mulf %24, %25 : vector<2x32xf32>
      %c0_21 = arith.constant 0 : index
      %c0_22 = arith.constant 0 : index
      %27 = vector.load %arg5[%c0_21, %c0_22] : memref<2x32xf32, #tpu.memory_space<vmem>>, vector<2x32xf32>
      tpu.vector_store %arg5[%c0_21, %c0_22], %26 {strides = array<i32>} : memref<2x32xf32, #tpu.memory_space<vmem>>, vector<2x32xf32>,
    } else {
    }
    return
  }
  func.func @transform_0(%arg0: i32, %arg1: i32, %arg2: i32) -> (i32, i32) {
    %c0_i32 = arith.constant 0 : i32
    return %arg0, %arg2 : i32, i32
  }
  func.func @transform_1(%arg0: i32, %arg1: i32, %arg2: i32) -> (i32, i32, i32) {
    %c0_i32 = arith.constant 0 : i32
    return %arg0, %arg2, %arg1 : i32, i32, i32
  }
  func.func @transform_2(%arg0: i32, %arg1: i32, %arg2: i32) -> (i32, i32) {
    %c0_i32 = arith.constant 0 : i32
    return %arg0, %arg1 : i32, i32
  }
}

</mosaic_0001>

<llo_original>
// kernel: tpu_custom_call.1
$region0: #{tpu_custom_call.1}
  #allocation0 [shape = 'u32[]', space=smem, size = 0x4, offset = 0x4, fixed_abs, tag = 'smem constant byte address 0x4 - core index']
  #allocation1 [shape = 'u32[144,128]{1,0:T(1,128)}', space=vmem, size = 0x12000, scoped, tag = 'internal scratch']
  #allocation2 [shape = 'f32[2,32]{1,0:T(2,128)}', space=vmem, size = 0x400, scoped, tag = 'scratch operand']
  #allocation3 [shape = 'f32[2,1]{1,0:T(2,128)}', space=vmem, size = 0x400, scoped, tag = 'scratch operand']
  %s0 = inlined_call_operand.hbm [shape: s32[2,8], index: 0, kind: input, shape index: {}]
  %s1 = inlined_call_operand.hbm [shape: f32[2,8,32], index: 1, kind: input, shape index: {}]
  %s2 = inlined_call_operand.hbm [shape: f32[2,32], index: 2, kind: output, shape index: {}]
  %s3 = sld [smem:[#allocation0]]
  $region34: #{tpu_custom_call.1} parent=0
    _
  %s5 = ssub.s32 1, %s3
  %s6 = scalar_select 0, %s5, %s3
  $region1: #{tpu_custom_call.1} parent=0
    #allocation4 [shape = 'u8[1024]{0}', space=vmem, size = 0x400, scoped, tag = 'input window, operand 0, single buffered']
    #allocation5 [shape = 's32[1]{0}', space=sflag, size = 0x4, scoped, tag = 'scoped memory for tpu_custom_call.1']
    #allocation6 [shape = 's32[1]{0}', space=sflag, size = 0x4, scoped, tag = 'scoped memory for tpu_custom_call.1']
    #allocation7 [shape = 'u8[8192]{0}', space=vmem, size = 0x2000, scoped, tag = 'input window, operand 1, single buffered']
    #allocation8 [shape = 's32[1]{0}', space=sflag, size = 0x4, scoped, tag = 'scoped memory for tpu_custom_call.1']
    #allocation9 [shape = 'u8[1024]{0}', space=vmem, size = 0x400, scoped, tag = 'output window, operand 0, single buffered']
    %7 = vsyncpa [#allocation5], 0
    %8 = vsyncpa [#allocation8], 0
    %9 = vsyncpa [#allocation6], 0
    // Predicated region
    $region2: #{tpu_custom_call.1} parent=1 // pred_check
      _
    $region3: #{tpu_custom_call.1} parent=1 // pred_check_branch
      %11 = sbr.rel (0) target = $region5
    $region4: #{tpu_custom_call.1} parent=1 // pred_region
      %s13 = ssub.s32 32, 32
      %14 = vsyncadd [#allocation5], %s13
      %s16 = sshll.u32 [#allocation4], 4
      %s17 = int_to_ptr.vmem [resolvable:$true] %s16
      %19 = dma.hbm_to_vmem [thread:$0]  %s0, 32, %s17, [#allocation5]
    $region5: #{tpu_custom_call.1} parent=1 // pred_fallthru
      _
    // Predicated region
    $region6: #{tpu_custom_call.1} parent=1 // pred_check
      _
    $region7: #{tpu_custom_call.1} parent=1 // pred_check_branch
      %21 = sbr.rel (0) target = $region9
    $region8: #{tpu_custom_call.1} parent=1 // pred_region
      %s23 = ssub.s32 256, 256
      %24 = vsyncadd [#allocation8], %s23
      %s25 = sshll.u32 [#allocation7], 4
      %s26 = int_to_ptr.vmem [resolvable:$true] %s25
      %31 = dma.hbm_to_vmem [thread:$0]  %s1, 256, %s26, [#allocation8], 128, 128, 8
    $region9: #{tpu_custom_call.1} parent=1 // pred_fallthru
      _
    // Predicated region
    $region10: #{tpu_custom_call.1} parent=1 // pred_check
      _
    $region11: #{tpu_custom_call.1} parent=1 // pred_check_branch
      %33 = sbr.rel (0) target = $region13
    $region12: #{tpu_custom_call.1} parent=1 // pred_region
      %34 = dma.done [#allocation5], 32
    $region13: #{tpu_custom_call.1} parent=1 // pred_fallthru
      _
    // Predicated region
    $region14: #{tpu_custom_call.1} parent=1 // pred_check
      _
    $region15: #{tpu_custom_call.1} parent=1 // pred_check_branch
      %36 = sbr.rel (0) target = $region17
    $region16: #{tpu_custom_call.1} parent=1 // pred_region
      %37 = dma.done [#allocation8], 256
    $region17: #{tpu_custom_call.1} parent=1 // pred_fallthru
      _
    %p38 = scmp.eq.s32.totalorder 0, 0
    // Predicated region
    $region18: #{tpu_custom_call.1} parent=1 // pred_check
      %p39 = pneg %p38
    $region19: #{tpu_custom_call.1} parent=1 // pred_check_branch
      %41 = sbr.rel (%p39) target = $region21
    $region20: #{tpu_custom_call.1} parent=1 // pred_region
      %vm42 = vcmask 254976
      %43 = vst.msk [vmem:[#allocation2] sm:$0x3] %vm42, 0.0
      %vm44 = vcmask 1024
      %45 = vst.msk [vmem:[#allocation3] sm:$0x3] %vm44, 0.0
    $region21: #{tpu_custom_call.1} parent=1 // pred_fallthru
      _
    %v46 = vld [vmem:[#allocation4] sm:$0x3]
    %v47 = vcvt.s32.f32 %v46
    %v48 = vld [vmem:[#allocation2] sm:$0x3]
    %v49 = vld [vmem:[#allocation7] sm:$0xff]
    %v50 = vld [vmem:[#allocation7 + $0x8] sm:$0xff]
    %v51 = vlaneseq
    %v52 = vshrl.u32 %v51, 7
    %v53 = vsub.s32 0, %v52
    %v54 = vrot.slane %v47, %v53
    %56 = vbcast.lane.b32.xlu0 %v54, 256
    %v57 = vpop.permute.xlu0 %56
    %v58 = vlaneseq
    %v59 = vshrl.u32 %v58, 7
    %v60 = vsub.s32 1, %v59
    %v61 = vrot.slane %v47, %v60
    %63 = vbcast.lane.b32.xlu0 %v61, 256
    %v64 = vpop.permute.xlu0 %63
    %v65 = vmul.f32 %v49, %v57
    %v66 = vmul.f32 %v50, %v64
    %vm67 = vcmask 261120
    %v68 = vsel %vm67, %v65, 0.0
    %v69 = vrot.slane %v68, 4
    %v70 = vadd.f32 %v68, %v69
    %v71 = vrot.slane %v70, 2
    %v72 = vadd.f32 %v70, %v71
    %v73 = vrot.slane %v72, 1
    %v74 = vadd.f32 %v72, %v73
    %v75 = vsel %vm67, %v66, 0.0
    %v76 = vrot.slane %v75, 4
    %v77 = vadd.f32 %v75, %v76
    %v78 = vrot.slane %v77, 2
    %v79 = vadd.f32 %v77, %v78
    %v80 = vrot.slane %v79, 1
    %v81 = vadd.f32 %v79, %v80
    %vm84 = vcmask 1041409
    %v85 = vsel %vm84, %v81, %v74
    %v87 = vadd.f32 %v48, %v85
    %vm88 = vcmask 254976
    %89 = vst.msk [vmem:[#allocation2] sm:$0x3] %vm88, %v87
    %v90 = vld [vmem:[#allocation3] sm:$0x3]
    %vm91 = vcmask 58368
    %v92 = vsel %vm91, %v47, 0.0
    %93 = vadd.xlane.f32.xlu0 %v92
    %v94 = vpop.xlane.xlu0 %93
    %v95 = vadd.f32 %v90, %v94
    %vm96 = vcmask 1024
    %97 = vst.msk [vmem:[#allocation3] sm:$0x3] %vm96, %v95
    // Predicated region
    $region22: #{tpu_custom_call.1} parent=1 // pred_check
      %p98 = pneg %p38
    $region23: #{tpu_custom_call.1} parent=1 // pred_check_branch
      %100 = sbr.rel (%p98) target = $region25
    $region24: #{tpu_custom_call.1} parent=1 // pred_region
      %v101 = vld [vmem:[#allocation3] sm:$0x3]
      %v102 = vrcp.pop %v101
      %v103 = vmul.f32 1.0, %v102
      %v104 = vld [vmem:[#allocation2] sm:$0x3]
      %106 = vset.pattern.permute.xlu0 0
      %107 = vperm.xlu0 %106, %v103
      %v108 = vpop.permute.xlu0 %107
      %v110 = vmul.f32 %v104, %v108
      %111 = vst.msk [vmem:[#allocation9] sm:$0x3] %vm88, %v110
    $region25: #{tpu_custom_call.1} parent=1 // pred_fallthru
      _
    // Predicated region
    $region26: #{tpu_custom_call.1} parent=1 // pred_check
      _
    $region27: #{tpu_custom_call.1} parent=1 // pred_check_branch
      %113 = sbr.rel (0) target = $region29
    $region28: #{tpu_custom_call.1} parent=1 // pred_region
      %s115 = ssub.s32 32, 32
      %116 = vsyncadd [#allocation6], %s115
      %s118 = sshll.u32 [#allocation9], 4
      %s119 = int_to_ptr.vmem [resolvable:$true] %s118
      %121 = dma.vmem_to_hbm [thread:$0]  %s119, 32, %s2, [#allocation6]
    $region29: #{tpu_custom_call.1} parent=1 // pred_fallthru
      _
    // Predicated region
    $region30: #{tpu_custom_call.1} parent=1 // pred_check
      _
    $region31: #{tpu_custom_call.1} parent=1 // pred_check_branch
      %123 = sbr.rel (0) target = $region33
    $region32: #{tpu_custom_call.1} parent=1 // pred_region
      %124 = dma.done [#allocation6], 32
    $region33: #{tpu_custom_call.1} parent=1 // pred_fallthru
      _
    %125 = vsyncpa [#allocation5], 1
    %126 = vsyncpa [#allocation8], 1
    %127 = vsyncpa [#allocation6], 1

</llo_original>
